<compile_context>
chip_gen: v7x
topology: tpu7x:2x2x1
jax: 0.10.0
libtpu: 0.0.40
codegen_flags: <defaults>
</compile_context>

<pallas_src>
import jax
import jax.numpy as jnp
from jax import lax
from jax.experimental import pallas as pl
from jax.experimental.pallas import tpu as pltpu

_FULL_UNROLL_MAX_L = 32   # fully unroll the recurrence below this length
_FORI_UNROLL = 8          # unroll factor for the fori_loop path
_VMEM_BLOCK_BUDGET = 16 * 1024 * 1024  # 3 slabs x 2 buffers per grid step


def _pick_sublane_tile(L, S):
    """Largest multiple-of-8 divisor of S whose (L, St, 128) blocks fit the
    VMEM budget, preferring tiles that leave >= 2 grid steps (dual-TC v7x)."""
    def fits(st):
        # x + out_fwd + out_bwd slabs, double-buffered, f32.
        return 6 * L * st * 128 * 4 <= _VMEM_BLOCK_BUDGET

    divisors = [st for st in range(8, S + 1, 8) if S % st == 0]
    for st in reversed(divisors):          # prefer >= 2 parallel grid steps
        if fits(st) and S // st >= 2:
            return st
    for st in reversed(divisors):          # otherwise largest fitting tile
        if fits(st):
            return st
    return 8                               # minimal tile (still within limit)


def _make_scan_pair_kernel(L):
    def kernel(x_ref, wf_ref, bf_ref, wb_ref, bb_ref, of_ref, ob_ref):
        # x_ref/of_ref/ob_ref : (L, St, 128) lane-dense slabs; scan over axis 0.
        # wf/bf, wb/bb        : (St, 128) per-lane weight/bias, fwd and bwd.
        wf = wf_ref[...]
        bf = bf_ref[...]
        wb = wb_ref[...]
        bb = bb_ref[...]

        # Boundary rows pass through unchanged (clone-initialized outputs).
        hf = x_ref[0]
        of_ref[0] = hf
        hb = x_ref[L - 1]
        ob_ref[L - 1] = hb

        if L <= _FULL_UNROLL_MAX_L:
            # Fully unrolled, forward/backward interleaved for ILP.
            for i in range(1, L):
                j = L - 1 - i
                hf = jnp.maximum(x_ref[i] + wf * hf + bf, 0.0)
                hb = jnp.maximum(x_ref[j] + wb * hb + bb, 0.0)
                of_ref[i] = hf
                ob_ref[j] = hb
        else:
            # Bounded-unroll loop: keeps code size and vreg live ranges small.
            def body(i, carry):
                hf, hb = carry
                j = L - 1 - i
                hf = jnp.maximum(x_ref[i] + wf * hf + bf, 0.0)
                hb = jnp.maximum(x_ref[j] + wb * hb + bb, 0.0)
                of_ref[i] = hf
                ob_ref[j] = hb
                return hf, hb

            lax.fori_loop(1, L, body, (hf, hb), unroll=_FORI_UNROLL)

    return kernel


def _scan_pair(x2d, w_fwd, b_fwd, w_bwd, b_bwd):
    """Forward + backward ReLU recurrences over axis 0 of a (L, P) slab.

    x2d: (L, P); w_*/b_*: (1, P) per-lane scalars. Returns two (L, P) arrays.
    """
    L, P = x2d.shape

    # Pad lanes so each scan step is a whole number of (8, 128) vreg tiles.
    S = -(-P // 128)           # ceil(P / 128) lanes-of-128
    S = -(-S // 8) * 8         # round sublane count up to a multiple of 8
    P_pad = S * 128
    if P_pad != P:
        pad = P_pad - P
        x2d = jnp.pad(x2d, ((0, 0), (0, pad)))
        w_fwd, b_fwd, w_bwd, b_bwd = (
            jnp.pad(v, ((0, 0), (0, pad)))
            for v in (w_fwd, b_fwd, w_bwd, b_bwd))

    x3 = x2d.reshape(L, S, 128)
    wf = w_fwd.reshape(S, 128)
    bf = b_fwd.reshape(S, 128)
    wb = w_bwd.reshape(S, 128)
    bb = b_bwd.reshape(S, 128)

    St = _pick_sublane_tile(L, S)
    grid = (S // St,)

    slab_spec = pl.BlockSpec((L, St, 128), lambda i: (0, i, 0))
    coef_spec = pl.BlockSpec((St, 128), lambda i: (i, 0))

    of3, ob3 = pl.pallas_call(
        _make_scan_pair_kernel(L),
        out_shape=(jax.ShapeDtypeStruct((L, S, 128), x3.dtype),
                   jax.ShapeDtypeStruct((L, S, 128), x3.dtype)),
        grid_spec=pltpu.PrefetchScalarGridSpec(
            num_scalar_prefetch=0,
            grid=grid,
            in_specs=[slab_spec, coef_spec, coef_spec, coef_spec, coef_spec],
            out_specs=(slab_spec, slab_spec),
        ),
        compiler_params=pltpu.CompilerParams(
            dimension_semantics=("parallel",),
            vmem_limit_bytes=32 * 1024 * 1024),
    )(x3, wf, bf, wb, bb)

    of = of3.reshape(L, P_pad)[:, :P]
    ob = ob3.reshape(L, P_pad)[:, :P]
    return of, ob


@jax.jit
def spacial_irnn(x, w_up, w_right, w_down, w_left,
                 b_up, b_right, b_down, b_left):
    """Forward of Spacial_IRNN.

    x: (N, C, H, W) float32
    w_*: (C, 1, 1, 1) depthwise 1x1 conv weights (per-channel scalars)
    b_*: (C,) biases
    Returns (out_up, out_right, out_down, out_left), each (N, C, H, W).
    """
    N, C, H, W = x.shape
    wu, wr, wd, wl = (w.reshape(C) for w in (w_up, w_right, w_down, w_left))

    def bcast(v, X):  # (C,) -> (1, N*C*X) matching the (N, C, X) lane flattening
        return jnp.broadcast_to(v[None, :, None], (N, C, X)).reshape(1, N * C * X)

    # ---- vertical scans: scan over H, lanes = N*C*W (lane-dense) ----
    xv = jnp.transpose(x, (2, 0, 1, 3)).reshape(H, N * C * W)
    o_down, o_up = _scan_pair(xv,
                              bcast(wd, W), bcast(b_down, W),
                              bcast(wu, W), bcast(b_up, W))
    out_down = o_down.reshape(H, N, C, W).transpose(1, 2, 0, 3)
    out_up = o_up.reshape(H, N, C, W).transpose(1, 2, 0, 3)

    # ---- horizontal scans: scan over W, lanes = N*C*H (lane-dense) ----
    xh = jnp.transpose(x, (3, 0, 1, 2)).reshape(W, N * C * H)
    o_right, o_left = _scan_pair(xh,
                                 bcast(wr, H), bcast(b_right, H),
                                 bcast(wl, H), bcast(b_left, H))
    out_right = o_right.reshape(W, N, C, H).transpose(1, 2, 3, 0)
    out_left = o_left.reshape(W, N, C, H).transpose(1, 2, 3, 0)

    return out_up, out_right, out_down, out_left


def _reference_irnn(x, w_up, w_right, w_down, w_left,
                    b_up, b_right, b_down, b_left):
    """Pure-JAX reference of the 4-direction IRNN recurrence."""
    N, C, H, W = x.shape
    wu, wr, wd, wl = (w.reshape(1, C, 1) for w in (w_up, w_right, w_down, w_left))
    bu, br, bd, bl = (b.reshape(1, C, 1) for b in (b_up, b_right, b_down, b_left))

    # down: rows top -> bottom
    h = x[:, :, 0, :]
    rows = [h]
    for i in range(1, H):
        h = jnp.maximum(x[:, :, i, :] + wd * h + bd, 0.0)
        rows.append(h)
    out_down = jnp.stack(rows, axis=2)

    # up: rows bottom -> top
    h = x[:, :, H - 1, :]
    rows = [h]
    for i in range(H - 2, -1, -1):
        h = jnp.maximum(x[:, :, i, :] + wu * h + bu, 0.0)
        rows.append(h)
    out_up = jnp.stack(rows[::-1], axis=2)

    # right: cols left -> right
    h = x[:, :, :, 0]
    cols = [h]
    for j in range(1, W):
        h = jnp.maximum(x[:, :, :, j] + wr * h + br, 0.0)
        cols.append(h)
    out_right = jnp.stack(cols, axis=3)

    # left: cols right -> left
    h = x[:, :, :, W - 1]
    cols = [h]
    for j in range(W - 2, -1, -1):
        h = jnp.maximum(x[:, :, :, j] + wl * h + bl, 0.0)
        cols.append(h)
    out_left = jnp.stack(cols[::-1], axis=3)

    return out_up, out_right, out_down, out_left


if __name__ == "__main__":
    # Spacial_IRNN(in_channels=4, alpha=1.0) on a (2, 4, 16, 16) input.
    N, C, H, W = 2, 4, 16, 16
    alpha = 1.0

    key = jax.random.PRNGKey(0)
    kx, kb = jax.random.split(key, 2)
    x = jax.random.normal(kx, (N, C, H, W), dtype=jnp.float32)

    # __init__: all four directional weights are alpha per channel, shape (C,1,1,1).
    w_up = jnp.full((C, 1, 1, 1), alpha, jnp.float32)
    w_right = jnp.full((C, 1, 1, 1), alpha, jnp.float32)
    w_down = jnp.full((C, 1, 1, 1), alpha, jnp.float32)
    w_left = jnp.full((C, 1, 1, 1), alpha, jnp.float32)
    # Conv2d biases are randomly initialized; use small deterministic values.
    b_up, b_right, b_down, b_left = [
        0.1 * jax.random.normal(k, (C,), dtype=jnp.float32)
        for k in jax.random.split(kb, 4)
    ]

    outs = spacial_irnn(x, w_up, w_right, w_down, w_left,
                        b_up, b_right, b_down, b_left)
    outs = jax.block_until_ready(outs)

    refs = _reference_irnn(x, w_up, w_right, w_down, w_left,
                           b_up, b_right, b_down, b_left)
    for name, o, r in zip(("up", "right", "down", "left"), outs, refs):
        assert o.shape == r.shape, (name, o.shape, r.shape)
        err = float(jnp.max(jnp.abs(o - r)))
        assert jnp.allclose(o, r, atol=1e-4, rtol=1e-4), (name, err)

    print("KERNEL_OK")
</pallas_src>

<mosaic_0001>
module attributes {stable_mosaic.version = 11 : i64} {
  func.func @kernel(%arg0: i32, %arg1: memref<16x8x128xf32, #tpu.memory_space<vmem>>, %arg2: memref<8x128xf32, #tpu.memory_space<vmem>>, %arg3: memref<8x128xf32, #tpu.memory_space<vmem>>, %arg4: memref<8x128xf32, #tpu.memory_space<vmem>>, %arg5: memref<8x128xf32, #tpu.memory_space<vmem>>, %arg6: memref<16x8x128xf32, #tpu.memory_space<vmem>>, %arg7: memref<16x8x128xf32, #tpu.memory_space<vmem>>) attributes {dimension_semantics = [#tpu.dimension_semantics<parallel>], iteration_bounds = array<i64: 1>, scalar_prefetch = 0 : i64, scratch_operands = 0 : i64, tpu.core_type = #tpu.core_type<tc>, window_params = [{transform_indices = @transform_0, window_bounds = array<i64: 16, 8, 128>}, {transform_indices = @transform_1, window_bounds = array<i64: 8, 128>}, {transform_indices = @transform_2, window_bounds = array<i64: 8, 128>}, {transform_indices = @transform_3, window_bounds = array<i64: 8, 128>}, {transform_indices = @transform_4, window_bounds = array<i64: 8, 128>}, {transform_indices = @transform_5, window_bounds = array<i64: 16, 8, 128>}, {transform_indices = @transform_6, window_bounds = array<i64: 16, 8, 128>}]} {
    %c0 = arith.constant 0 : index
    %c0_0 = arith.constant 0 : index
    %0 = vector.load %arg2[%c0, %c0_0] : memref<8x128xf32, #tpu.memory_space<vmem>>, vector<8x128xf32>
    %c0_1 = arith.constant 0 : index
    %c0_2 = arith.constant 0 : index
    %1 = vector.load %arg3[%c0_1, %c0_2] : memref<8x128xf32, #tpu.memory_space<vmem>>, vector<8x128xf32>
    %c0_3 = arith.constant 0 : index
    %c0_4 = arith.constant 0 : index
    %2 = vector.load %arg4[%c0_3, %c0_4] : memref<8x128xf32, #tpu.memory_space<vmem>>, vector<8x128xf32>
    %c0_5 = arith.constant 0 : index
    %c0_6 = arith.constant 0 : index
    %3 = vector.load %arg5[%c0_5, %c0_6] : memref<8x128xf32, #tpu.memory_space<vmem>>, vector<8x128xf32>
    %c0_7 = arith.constant 0 : index
    %c0_8 = arith.constant 0 : index
    %c0_9 = arith.constant 0 : index
    %4 = vector.load %arg1[%c0_7, %c0_8, %c0_9] : memref<16x8x128xf32, #tpu.memory_space<vmem>>, vector<1x8x128xf32>
    %5 = vector.shape_cast %4 : vector<1x8x128xf32> to vector<8x128xf32>
    %c0_10 = arith.constant 0 : index
    %c0_11 = arith.constant 0 : index
    %c0_12 = arith.constant 0 : index
    %6 = vector.load %arg6[%c0_10, %c0_11, %c0_12] : memref<16x8x128xf32, #tpu.memory_space<vmem>>, vector<1x8x128xf32>
    %7 = vector.shape_cast %6 : vector<1x8x128xf32> to vector<8x128xf32>
    %8 = vector.shape_cast %5 : vector<8x128xf32> to vector<1x8x128xf32>
    tpu.vector_store %arg6[%c0_10, %c0_11, %c0_12], %8 {strides = array<i32>} : memref<16x8x128xf32, #tpu.memory_space<vmem>>, vector<1x8x128xf32>,
    %c15 = arith.constant 15 : index
    %c0_13 = arith.constant 0 : index
    %c0_14 = arith.constant 0 : index
    %9 = vector.load %arg1[%c15, %c0_13, %c0_14] : memref<16x8x128xf32, #tpu.memory_space<vmem>>, vector<1x8x128xf32>
    %10 = vector.shape_cast %9 : vector<1x8x128xf32> to vector<8x128xf32>
    %c15_15 = arith.constant 15 : index
    %c0_16 = arith.constant 0 : index
    %c0_17 = arith.constant 0 : index
    %11 = vector.load %arg7[%c15_15, %c0_16, %c0_17] : memref<16x8x128xf32, #tpu.memory_space<vmem>>, vector<1x8x128xf32>
    %12 = vector.shape_cast %11 : vector<1x8x128xf32> to vector<8x128xf32>
    %13 = vector.shape_cast %10 : vector<8x128xf32> to vector<1x8x128xf32>
    tpu.vector_store %arg7[%c15_15, %c0_16, %c0_17], %13 {strides = array<i32>} : memref<16x8x128xf32, #tpu.memory_space<vmem>>, vector<1x8x128xf32>,
    %c1 = arith.constant 1 : index
    %c0_18 = arith.constant 0 : index
    %c0_19 = arith.constant 0 : index
    %14 = vector.load %arg1[%c1, %c0_18, %c0_19] : memref<16x8x128xf32, #tpu.memory_space<vmem>>, vector<1x8x128xf32>
    %15 = vector.shape_cast %14 : vector<1x8x128xf32> to vector<8x128xf32>
    %16 = arith.mulf %0, %5 : vector<8x128xf32>
    %17 = arith.addf %15, %16 : vector<8x128xf32>
    %18 = arith.addf %17, %1 : vector<8x128xf32>
    %cst = arith.constant 0.000000e+00 : f32
    %19 = vector.broadcast %cst : f32 to vector<8x128xf32>
    %20 = arith.maximumf %18, %19 : vector<8x128xf32>
    %c14 = arith.constant 14 : index
    %c0_20 = arith.constant 0 : index
    %c0_21 = arith.constant 0 : index
    %21 = vector.load %arg1[%c14, %c0_20, %c0_21] : memref<16x8x128xf32, #tpu.memory_space<vmem>>, vector<1x8x128xf32>
    %22 = vector.shape_cast %21 : vector<1x8x128xf32> to vector<8x128xf32>
    %23 = arith.mulf %2, %10 : vector<8x128xf32>
    %24 = arith.addf %22, %23 : vector<8x128xf32>
    %25 = arith.addf %24, %3 : vector<8x128xf32>
    %cst_22 = arith.constant 0.000000e+00 : f32
    %26 = vector.broadcast %cst_22 : f32 to vector<8x128xf32>
    %27 = arith.maximumf %25, %26 : vector<8x128xf32>
    %c1_23 = arith.constant 1 : index
    %c0_24 = arith.constant 0 : index
    %c0_25 = arith.constant 0 : index
    %28 = vector.load %arg6[%c1_23, %c0_24, %c0_25] : memref<16x8x128xf32, #tpu.memory_space<vmem>>, vector<1x8x128xf32>
    %29 = vector.shape_cast %28 : vector<1x8x128xf32> to vector<8x128xf32>
    %30 = vector.shape_cast %20 : vector<8x128xf32> to vector<1x8x128xf32>
    tpu.vector_store %arg6[%c1_23, %c0_24, %c0_25], %30 {strides = array<i32>} : memref<16x8x128xf32, #tpu.memory_space<vmem>>, vector<1x8x128xf32>,
    %c14_26 = arith.constant 14 : index
    %c0_27 = arith.constant 0 : index
    %c0_28 = arith.constant 0 : index
    %31 = vector.load %arg7[%c14_26, %c0_27, %c0_28] : memref<16x8x128xf32, #tpu.memory_space<vmem>>, vector<1x8x128xf32>
    %32 = vector.shape_cast %31 : vector<1x8x128xf32> to vector<8x128xf32>
    %33 = vector.shape_cast %27 : vector<8x128xf32> to vector<1x8x128xf32>
    tpu.vector_store %arg7[%c14_26, %c0_27, %c0_28], %33 {strides = array<i32>} : memref<16x8x128xf32, #tpu.memory_space<vmem>>, vector<1x8x128xf32>,
    %c2 = arith.constant 2 : index
    %c0_29 = arith.constant 0 : index
    %c0_30 = arith.constant 0 : index
    %34 = vector.load %arg1[%c2, %c0_29, %c0_30] : memref<16x8x128xf32, #tpu.memory_space<vmem>>, vector<1x8x128xf32>
    %35 = vector.shape_cast %34 : vector<1x8x128xf32> to vector<8x128xf32>
    %36 = arith.mulf %0, %20 : vector<8x128xf32>
    %37 = arith.addf %35, %36 : vector<8x128xf32>
    %38 = arith.addf %37, %1 : vector<8x128xf32>
    %cst_31 = arith.constant 0.000000e+00 : f32
    %39 = vector.broadcast %cst_31 : f32 to vector<8x128xf32>
    %40 = arith.maximumf %38, %39 : vector<8x128xf32>
    %c13 = arith.constant 13 : index
    %c0_32 = arith.constant 0 : index
    %c0_33 = arith.constant 0 : index
    %41 = vector.load %arg1[%c13, %c0_32, %c0_33] : memref<16x8x128xf32, #tpu.memory_space<vmem>>, vector<1x8x128xf32>
    %42 = vector.shape_cast %41 : vector<1x8x128xf32> to vector<8x128xf32>
    %43 = arith.mulf %2, %27 : vector<8x128xf32>
    %44 = arith.addf %42, %43 : vector<8x128xf32>
    %45 = arith.addf %44, %3 : vector<8x128xf32>
    %cst_34 = arith.constant 0.000000e+00 : f32
    %46 = vector.broadcast %cst_34 : f32 to vector<8x128xf32>
    %47 = arith.maximumf %45, %46 : vector<8x128xf32>
    %c2_35 = arith.constant 2 : index
    %c0_36 = arith.constant 0 : index
    %c0_37 = arith.constant 0 : index
    %48 = vector.load %arg6[%c2_35, %c0_36, %c0_37] : memref<16x8x128xf32, #tpu.memory_space<vmem>>, vector<1x8x128xf32>
    %49 = vector.shape_cast %48 : vector<1x8x128xf32> to vector<8x128xf32>
    %50 = vector.shape_cast %40 : vector<8x128xf32> to vector<1x8x128xf32>
    tpu.vector_store %arg6[%c2_35, %c0_36, %c0_37], %50 {strides = array<i32>} : memref<16x8x128xf32, #tpu.memory_space<vmem>>, vector<1x8x128xf32>,
    %c13_38 = arith.constant 13 : index
    %c0_39 = arith.constant 0 : index
    %c0_40 = arith.constant 0 : index
    %51 = vector.load %arg7[%c13_38, %c0_39, %c0_40] : memref<16x8x128xf32, #tpu.memory_space<vmem>>, vector<1x8x128xf32>
    %52 = vector.shape_cast %51 : vector<1x8x128xf32> to vector<8x128xf32>
    %53 = vector.shape_cast %47 : vector<8x128xf32> to vector<1x8x128xf32>
    tpu.vector_store %arg7[%c13_38, %c0_39, %c0_40], %53 {strides = array<i32>} : memref<16x8x128xf32, #tpu.memory_space<vmem>>, vector<1x8x128xf32>,
    %c3 = arith.constant 3 : index
    %c0_41 = arith.constant 0 : index
    %c0_42 = arith.constant 0 : index
    %54 = vector.load %arg1[%c3, %c0_41, %c0_42] : memref<16x8x128xf32, #tpu.memory_space<vmem>>, vector<1x8x128xf32>
    %55 = vector.shape_cast %54 : vector<1x8x128xf32> to vector<8x128xf32>
    %56 = arith.mulf %0, %40 : vector<8x128xf32>
    %57 = arith.addf %55, %56 : vector<8x128xf32>
    %58 = arith.addf %57, %1 : vector<8x128xf32>
    %cst_43 = arith.constant 0.000000e+00 : f32
    %59 = vector.broadcast %cst_43 : f32 to vector<8x128xf32>
    %60 = arith.maximumf %58, %59 : vector<8x128xf32>
    %c12 = arith.constant 12 : index
    %c0_44 = arith.constant 0 : index
    %c0_45 = arith.constant 0 : index
    %61 = vector.load %arg1[%c12, %c0_44, %c0_45] : memref<16x8x128xf32, #tpu.memory_space<vmem>>, vector<1x8x128xf32>
    %62 = vector.shape_cast %61 : vector<1x8x128xf32> to vector<8x128xf32>
    %63 = arith.mulf %2, %47 : vector<8x128xf32>
    %64 = arith.addf %62, %63 : vector<8x128xf32>
    %65 = arith.addf %64, %3 : vector<8x128xf32>
    %cst_46 = arith.constant 0.000000e+00 : f32
    %66 = vector.broadcast %cst_46 : f32 to vector<8x128xf32>
    %67 = arith.maximumf %65, %66 : vector<8x128xf32>
    %c3_47 = arith.constant 3 : index
    %c0_48 = arith.constant 0 : index
    %c0_49 = arith.constant 0 : index
    %68 = vector.load %arg6[%c3_47, %c0_48, %c0_49] : memref<16x8x128xf32, #tpu.memory_space<vmem>>, vector<1x8x128xf32>
    %69 = vector.shape_cast %68 : vector<1x8x128xf32> to vector<8x128xf32>
    %70 = vector.shape_cast %60 : vector<8x128xf32> to vector<1x8x128xf32>
    tpu.vector_store %arg6[%c3_47, %c0_48, %c0_49], %70 {strides = array<i32>} : memref<16x8x128xf32, #tpu.memory_space<vmem>>, vector<1x8x128xf32>,
    %c12_50 = arith.constant 12 : index
    %c0_51 = arith.constant 0 : index
    %c0_52 = arith.constant 0 : index
    %71 = vector.load %arg7[%c12_50, %c0_51, %c0_52] : memref<16x8x128xf32, #tpu.memory_space<vmem>>, vector<1x8x128xf32>
    %72 = vector.shape_cast %71 : vector<1x8x128xf32> to vector<8x128xf32>
    %73 = vector.shape_cast %67 : vector<8x128xf32> to vector<1x8x128xf32>
    tpu.vector_store %arg7[%c12_50, %c0_51, %c0_52], %73 {strides = array<i32>} : memref<16x8x128xf32, #tpu.memory_space<vmem>>, vector<1x8x128xf32>,
    %c4 = arith.constant 4 : index
    %c0_53 = arith.constant 0 : index
    %c0_54 = arith.constant 0 : index
    %74 = vector.load %arg1[%c4, %c0_53, %c0_54] : memref<16x8x128xf32, #tpu.memory_space<vmem>>, vector<1x8x128xf32>
    %75 = vector.shape_cast %74 : vector<1x8x128xf32> to vector<8x128xf32>
    %76 = arith.mulf %0, %60 : vector<8x128xf32>
    %77 = arith.addf %75, %76 : vector<8x128xf32>
    %78 = arith.addf %77, %1 : vector<8x128xf32>
    %cst_55 = arith.constant 0.000000e+00 : f32
    %79 = vector.broadcast %cst_55 : f32 to vector<8x128xf32>
    %80 = arith.maximumf %78, %79 : vector<8x128xf32>
    %c11 = arith.constant 11 : index
    %c0_56 = arith.constant 0 : index
    %c0_57 = arith.constant 0 : index
    %81 = vector.load %arg1[%c11, %c0_56, %c0_57] : memref<16x8x128xf32, #tpu.memory_space<vmem>>, vector<1x8x128xf32>
    %82 = vector.shape_cast %81 : vector<1x8x128xf32> to vector<8x128xf32>
    %83 = arith.mulf %2, %67 : vector<8x128xf32>
    %84 = arith.addf %82, %83 : vector<8x128xf32>
    %85 = arith.addf %84, %3 : vector<8x128xf32>
    %cst_58 = arith.constant 0.000000e+00 : f32
    %86 = vector.broadcast %cst_58 : f32 to vector<8x128xf32>
    %87 = arith.maximumf %85, %86 : vector<8x128xf32>
    %c4_59 = arith.constant 4 : index
    %c0_60 = arith.constant 0 : index
    %c0_61 = arith.constant 0 : index
    %88 = vector.load %arg6[%c4_59, %c0_60, %c0_61] : memref<16x8x128xf32, #tpu.memory_space<vmem>>, vector<1x8x128xf32>
    %89 = vector.shape_cast %88 : vector<1x8x128xf32> to vector<8x128xf32>
    %90 = vector.shape_cast %80 : vector<8x128xf32> to vector<1x8x128xf32>
    tpu.vector_store %arg6[%c4_59, %c0_60, %c0_61], %90 {strides = array<i32>} : memref<16x8x128xf32, #tpu.memory_space<vmem>>, vector<1x8x128xf32>,
    %c11_62 = arith.constant 11 : index
    %c0_63 = arith.constant 0 : index
    %c0_64 = arith.constant 0 : index
    %91 = vector.load %arg7[%c11_62, %c0_63, %c0_64] : memref<16x8x128xf32, #tpu.memory_space<vmem>>, vector<1x8x128xf32>
    %92 = vector.shape_cast %91 : vector<1x8x128xf32> to vector<8x128xf32>
    %93 = vector.shape_cast %87 : vector<8x128xf32> to vector<1x8x128xf32>
    tpu.vector_store %arg7[%c11_62, %c0_63, %c0_64], %93 {strides = array<i32>} : memref<16x8x128xf32, #tpu.memory_space<vmem>>, vector<1x8x128xf32>,
    %c5 = arith.constant 5 : index
    %c0_65 = arith.constant 0 : index
    %c0_66 = arith.constant 0 : index
    %94 = vector.load %arg1[%c5, %c0_65, %c0_66] : memref<16x8x128xf32, #tpu.memory_space<vmem>>, vector<1x8x128xf32>
    %95 = vector.shape_cast %94 : vector<1x8x128xf32> to vector<8x128xf32>
    %96 = arith.mulf %0, %80 : vector<8x128xf32>
    %97 = arith.addf %95, %96 : vector<8x128xf32>
    %98 = arith.addf %97, %1 : vector<8x128xf32>
    %cst_67 = arith.constant 0.000000e+00 : f32
    %99 = vector.broadcast %cst_67 : f32 to vector<8x128xf32>
    %100 = arith.maximumf %98, %99 : vector<8x128xf32>
    %c10 = arith.constant 10 : index
    %c0_68 = arith.constant 0 : index
    %c0_69 = arith.constant 0 : index
    %101 = vector.load %arg1[%c10, %c0_68, %c0_69] : memref<16x8x128xf32, #tpu.memory_space<vmem>>, vector<1x8x128xf32>
    %102 = vector.shape_cast %101 : vector<1x8x128xf32> to vector<8x128xf32>
    %103 = arith.mulf %2, %87 : vector<8x128xf32>
    %104 = arith.addf %102, %103 : vector<8x128xf32>
    %105 = arith.addf %104, %3 : vector<8x128xf32>
    %cst_70 = arith.constant 0.000000e+00 : f32
    %106 = vector.broadcast %cst_70 : f32 to vector<8x128xf32>
    %107 = arith.maximumf %105, %106 : vector<8x128xf32>
    %c5_71 = arith.constant 5 : index
    %c0_72 = arith.constant 0 : index
    %c0_73 = arith.constant 0 : index
    %108 = vector.load %arg6[%c5_71, %c0_72, %c0_73] : memref<16x8x128xf32, #tpu.memory_space<vmem>>, vector<1x8x128xf32>
    %109 = vector.shape_cast %108 : vector<1x8x128xf32> to vector<8x128xf32>
    %110 = vector.shape_cast %100 : vector<8x128xf32> to vector<1x8x128xf32>
    tpu.vector_store %arg6[%c5_71, %c0_72, %c0_73], %110 {strides = array<i32>} : memref<16x8x128xf32, #tpu.memory_space<vmem>>, vector<1x8x128xf32>,
    %c10_74 = arith.constant 10 : index
    %c0_75 = arith.constant 0 : index
    %c0_76 = arith.constant 0 : index
    %111 = vector.load %arg7[%c10_74, %c0_75, %c0_76] : memref<16x8x128xf32, #tpu.memory_space<vmem>>, vector<1x8x128xf32>
    %112 = vector.shape_cast %111 : vector<1x8x128xf32> to vector<8x128xf32>
    %113 = vector.shape_cast %107 : vector<8x128xf32> to vector<1x8x128xf32>
    tpu.vector_store %arg7[%c10_74, %c0_75, %c0_76], %113 {strides = array<i32>} : memref<16x8x128xf32, #tpu.memory_space<vmem>>, vector<1x8x128xf32>,
    %c6 = arith.constant 6 : index
    %c0_77 = arith.constant 0 : index
    %c0_78 = arith.constant 0 : index
    %114 = vector.load %arg1[%c6, %c0_77, %c0_78] : memref<16x8x128xf32, #tpu.memory_space<vmem>>, vector<1x8x128xf32>
    %115 = vector.shape_cast %114 : vector<1x8x128xf32> to vector<8x128xf32>
    %116 = arith.mulf %0, %100 : vector<8x128xf32>
    %117 = arith.addf %115, %116 : vector<8x128xf32>
    %118 = arith.addf %117, %1 : vector<8x128xf32>
    %cst_79 = arith.constant 0.000000e+00 : f32
    %119 = vector.broadcast %cst_79 : f32 to vector<8x128xf32>
    %120 = arith.maximumf %118, %119 : vector<8x128xf32>
    %c9 = arith.constant 9 : index
    %c0_80 = arith.constant 0 : index
    %c0_81 = arith.constant 0 : index
    %121 = vector.load %arg1[%c9, %c0_80, %c0_81] : memref<16x8x128xf32, #tpu.memory_space<vmem>>, vector<1x8x128xf32>
    %122 = vector.shape_cast %121 : vector<1x8x128xf32> to vector<8x128xf32>
    %123 = arith.mulf %2, %107 : vector<8x128xf32>
    %124 = arith.addf %122, %123 : vector<8x128xf32>
    %125 = arith.addf %124, %3 : vector<8x128xf32>
    %cst_82 = arith.constant 0.000000e+00 : f32
    %126 = vector.broadcast %cst_82 : f32 to vector<8x128xf32>
    %127 = arith.maximumf %125, %126 : vector<8x128xf32>
    %c6_83 = arith.constant 6 : index
    %c0_84 = arith.constant 0 : index
    %c0_85 = arith.constant 0 : index
    %128 = vector.load %arg6[%c6_83, %c0_84, %c0_85] : memref<16x8x128xf32, #tpu.memory_space<vmem>>, vector<1x8x128xf32>
    %129 = vector.shape_cast %128 : vector<1x8x128xf32> to vector<8x128xf32>
    %130 = vector.shape_cast %120 : vector<8x128xf32> to vector<1x8x128xf32>
    tpu.vector_store %arg6[%c6_83, %c0_84, %c0_85], %130 {strides = array<i32>} : memref<16x8x128xf32, #tpu.memory_space<vmem>>, vector<1x8x128xf32>,
    %c9_86 = arith.constant 9 : index
    %c0_87 = arith.constant 0 : index
    %c0_88 = arith.constant 0 : index
    %131 = vector.load %arg7[%c9_86, %c0_87, %c0_88] : memref<16x8x128xf32, #tpu.memory_space<vmem>>, vector<1x8x128xf32>
    %132 = vector.shape_cast %131 : vector<1x8x128xf32> to vector<8x128xf32>
    %133 = vector.shape_cast %127 : vector<8x128xf32> to vector<1x8x128xf32>
    tpu.vector_store %arg7[%c9_86, %c0_87, %c0_88], %133 {strides = array<i32>} : memref<16x8x128xf32, #tpu.memory_space<vmem>>, vector<1x8x128xf32>,
    %c7 = arith.constant 7 : index
    %c0_89 = arith.constant 0 : index
    %c0_90 = arith.constant 0 : index
    %134 = vector.load %arg1[%c7, %c0_89, %c0_90] : memref<16x8x128xf32, #tpu.memory_space<vmem>>, vector<1x8x128xf32>
    %135 = vector.shape_cast %134 : vector<1x8x128xf32> to vector<8x128xf32>
    %136 = arith.mulf %0, %120 : vector<8x128xf32>
    %137 = arith.addf %135, %136 : vector<8x128xf32>
    %138 = arith.addf %137, %1 : vector<8x128xf32>
    %cst_91 = arith.constant 0.000000e+00 : f32
    %139 = vector.broadcast %cst_91 : f32 to vector<8x128xf32>
    %140 = arith.maximumf %138, %139 : vector<8x128xf32>
    %c8 = arith.constant 8 : index
    %c0_92 = arith.constant 0 : index
    %c0_93 = arith.constant 0 : index
    %141 = vector.load %arg1[%c8, %c0_92, %c0_93] : memref<16x8x128xf32, #tpu.memory_space<vmem>>, vector<1x8x128xf32>
    %142 = vector.shape_cast %141 : vector<1x8x128xf32> to vector<8x128xf32>
    %143 = arith.mulf %2, %127 : vector<8x128xf32>
    %144 = arith.addf %142, %143 : vector<8x128xf32>
    %145 = arith.addf %144, %3 : vector<8x128xf32>
    %cst_94 = arith.constant 0.000000e+00 : f32
    %146 = vector.broadcast %cst_94 : f32 to vector<8x128xf32>
    %147 = arith.maximumf %145, %146 : vector<8x128xf32>
    %c7_95 = arith.constant 7 : index
    %c0_96 = arith.constant 0 : index
    %c0_97 = arith.constant 0 : index
    %148 = vector.load %arg6[%c7_95, %c0_96, %c0_97] : memref<16x8x128xf32, #tpu.memory_space<vmem>>, vector<1x8x128xf32>
    %149 = vector.shape_cast %148 : vector<1x8x128xf32> to vector<8x128xf32>
    %150 = vector.shape_cast %140 : vector<8x128xf32> to vector<1x8x128xf32>
    tpu.vector_store %arg6[%c7_95, %c0_96, %c0_97], %150 {strides = array<i32>} : memref<16x8x128xf32, #tpu.memory_space<vmem>>, vector<1x8x128xf32>,
    %c8_98 = arith.constant 8 : index
    %c0_99 = arith.constant 0 : index
    %c0_100 = arith.constant 0 : index
    %151 = vector.load %arg7[%c8_98, %c0_99, %c0_100] : memref<16x8x128xf32, #tpu.memory_space<vmem>>, vector<1x8x128xf32>
    %152 = vector.shape_cast %151 : vector<1x8x128xf32> to vector<8x128xf32>
    %153 = vector.shape_cast %147 : vector<8x128xf32> to vector<1x8x128xf32>
    tpu.vector_store %arg7[%c8_98, %c0_99, %c0_100], %153 {strides = array<i32>} : memref<16x8x128xf32, #tpu.memory_space<vmem>>, vector<1x8x128xf32>,
    %c8_101 = arith.constant 8 : index
    %c0_102 = arith.constant 0 : index
    %c0_103 = arith.constant 0 : index
    %154 = vector.load %arg1[%c8_101, %c0_102, %c0_103] : memref<16x8x128xf32, #tpu.memory_space<vmem>>, vector<1x8x128xf32>
    %155 = vector.shape_cast %154 : vector<1x8x128xf32> to vector<8x128xf32>
    %156 = arith.mulf %0, %140 : vector<8x128xf32>
    %157 = arith.addf %155, %156 : vector<8x128xf32>
    %158 = arith.addf %157, %1 : vector<8x128xf32>
    %cst_104 = arith.constant 0.000000e+00 : f32
    %159 = vector.broadcast %cst_104 : f32 to vector<8x128xf32>
    %160 = arith.maximumf %158, %159 : vector<8x128xf32>
    %c7_105 = arith.constant 7 : index
    %c0_106 = arith.constant 0 : index
    %c0_107 = arith.constant 0 : index
    %161 = vector.load %arg1[%c7_105, %c0_106, %c0_107] : memref<16x8x128xf32, #tpu.memory_space<vmem>>, vector<1x8x128xf32>
    %162 = vector.shape_cast %161 : vector<1x8x128xf32> to vector<8x128xf32>
    %163 = arith.mulf %2, %147 : vector<8x128xf32>
    %164 = arith.addf %162, %163 : vector<8x128xf32>
    %165 = arith.addf %164, %3 : vector<8x128xf32>
    %cst_108 = arith.constant 0.000000e+00 : f32
    %166 = vector.broadcast %cst_108 : f32 to vector<8x128xf32>
    %167 = arith.maximumf %165, %166 : vector<8x128xf32>
    %c8_109 = arith.constant 8 : index
    %c0_110 = arith.constant 0 : index
    %c0_111 = arith.constant 0 : index
    %168 = vector.load %arg6[%c8_109, %c0_110, %c0_111] : memref<16x8x128xf32, #tpu.memory_space<vmem>>, vector<1x8x128xf32>
    %169 = vector.shape_cast %168 : vector<1x8x128xf32> to vector<8x128xf32>
    %170 = vector.shape_cast %160 : vector<8x128xf32> to vector<1x8x128xf32>
    tpu.vector_store %arg6[%c8_109, %c0_110, %c0_111], %170 {strides = array<i32>} : memref<16x8x128xf32, #tpu.memory_space<vmem>>, vector<1x8x128xf32>,
    %c7_112 = arith.constant 7 : index
    %c0_113 = arith.constant 0 : index
    %c0_114 = arith.constant 0 : index
    %171 = vector.load %arg7[%c7_112, %c0_113, %c0_114] : memref<16x8x128xf32, #tpu.memory_space<vmem>>, vector<1x8x128xf32>
    %172 = vector.shape_cast %171 : vector<1x8x128xf32> to vector<8x128xf32>
    %173 = vector.shape_cast %167 : vector<8x128xf32> to vector<1x8x128xf32>
    tpu.vector_store %arg7[%c7_112, %c0_113, %c0_114], %173 {strides = array<i32>} : memref<16x8x128xf32, #tpu.memory_space<vmem>>, vector<1x8x128xf32>,
    %c9_115 = arith.constant 9 : index
    %c0_116 = arith.constant 0 : index
    %c0_117 = arith.constant 0 : index
    %174 = vector.load %arg1[%c9_115, %c0_116, %c0_117] : memref<16x8x128xf32, #tpu.memory_space<vmem>>, vector<1x8x128xf32>
    %175 = vector.shape_cast %174 : vector<1x8x128xf32> to vector<8x128xf32>
    %176 = arith.mulf %0, %160 : vector<8x128xf32>
    %177 = arith.addf %175, %176 : vector<8x128xf32>
    %178 = arith.addf %177, %1 : vector<8x128xf32>
    %cst_118 = arith.constant 0.000000e+00 : f32
    %179 = vector.broadcast %cst_118 : f32 to vector<8x128xf32>
    %180 = arith.maximumf %178, %179 : vector<8x128xf32>
    %c6_119 = arith.constant 6 : index
    %c0_120 = arith.constant 0 : index
    %c0_121 = arith.constant 0 : index
    %181 = vector.load %arg1[%c6_119, %c0_120, %c0_121] : memref<16x8x128xf32, #tpu.memory_space<vmem>>, vector<1x8x128xf32>
    %182 = vector.shape_cast %181 : vector<1x8x128xf32> to vector<8x128xf32>
    %183 = arith.mulf %2, %167 : vector<8x128xf32>
    %184 = arith.addf %182, %183 : vector<8x128xf32>
    %185 = arith.addf %184, %3 : vector<8x128xf32>
    %cst_122 = arith.constant 0.000000e+00 : f32
    %186 = vector.broadcast %cst_122 : f32 to vector<8x128xf32>
    %187 = arith.maximumf %185, %186 : vector<8x128xf32>
    %c9_123 = arith.constant 9 : index
    %c0_124 = arith.constant 0 : index
    %c0_125 = arith.constant 0 : index
    %188 = vector.load %arg6[%c9_123, %c0_124, %c0_125] : memref<16x8x128xf32, #tpu.memory_space<vmem>>, vector<1x8x128xf32>
    %189 = vector.shape_cast %188 : vector<1x8x128xf32> to vector<8x128xf32>
    %190 = vector.shape_cast %180 : vector<8x128xf32> to vector<1x8x128xf32>
    tpu.vector_store %arg6[%c9_123, %c0_124, %c0_125], %190 {strides = array<i32>} : memref<16x8x128xf32, #tpu.memory_space<vmem>>, vector<1x8x128xf32>,
    %c6_126 = arith.constant 6 : index
    %c0_127 = arith.constant 0 : index
    %c0_128 = arith.constant 0 : index
    %191 = vector.load %arg7[%c6_126, %c0_127, %c0_128] : memref<16x8x128xf32, #tpu.memory_space<vmem>>, vector<1x8x128xf32>
    %192 = vector.shape_cast %191 : vector<1x8x128xf32> to vector<8x128xf32>
    %193 = vector.shape_cast %187 : vector<8x128xf32> to vector<1x8x128xf32>
    tpu.vector_store %arg7[%c6_126, %c0_127, %c0_128], %193 {strides = array<i32>} : memref<16x8x128xf32, #tpu.memory_space<vmem>>, vector<1x8x128xf32>,
    %c10_129 = arith.constant 10 : index
    %c0_130 = arith.constant 0 : index
    %c0_131 = arith.constant 0 : index
    %194 = vector.load %arg1[%c10_129, %c0_130, %c0_131] : memref<16x8x128xf32, #tpu.memory_space<vmem>>, vector<1x8x128xf32>
    %195 = vector.shape_cast %194 : vector<1x8x128xf32> to vector<8x128xf32>
    %196 = arith.mulf %0, %180 : vector<8x128xf32>
    %197 = arith.addf %195, %196 : vector<8x128xf32>
    %198 = arith.addf %197, %1 : vector<8x128xf32>
    %cst_132 = arith.constant 0.000000e+00 : f32
    %199 = vector.broadcast %cst_132 : f32 to vector<8x128xf32>
    %200 = arith.maximumf %198, %199 : vector<8x128xf32>
    %c5_133 = arith.constant 5 : index
    %c0_134 = arith.constant 0 : index
    %c0_135 = arith.constant 0 : index
    %201 = vector.load %arg1[%c5_133, %c0_134, %c0_135] : memref<16x8x128xf32, #tpu.memory_space<vmem>>, vector<1x8x128xf32>
    %202 = vector.shape_cast %201 : vector<1x8x128xf32> to vector<8x128xf32>
    %203 = arith.mulf %2, %187 : vector<8x128xf32>
    %204 = arith.addf %202, %203 : vector<8x128xf32>
    %205 = arith.addf %204, %3 : vector<8x128xf32>
    %cst_136 = arith.constant 0.000000e+00 : f32
    %206 = vector.broadcast %cst_136 : f32 to vector<8x128xf32>
    %207 = arith.maximumf %205, %206 : vector<8x128xf32>
    %c10_137 = arith.constant 10 : index
    %c0_138 = arith.constant 0 : index
    %c0_139 = arith.constant 0 : index
    %208 = vector.load %arg6[%c10_137, %c0_138, %c0_139] : memref<16x8x128xf32, #tpu.memory_space<vmem>>, vector<1x8x128xf32>
    %209 = vector.shape_cast %208 : vector<1x8x128xf32> to vector<8x128xf32>
    %210 = vector.shape_cast %200 : vector<8x128xf32> to vector<1x8x128xf32>
    tpu.vector_store %arg6[%c10_137, %c0_138, %c0_139], %210 {strides = array<i32>} : memref<16x8x128xf32, #tpu.memory_space<vmem>>, vector<1x8x128xf32>,
    %c5_140 = arith.constant 5 : index
    %c0_141 = arith.constant 0 : index
    %c0_142 = arith.constant 0 : index
    %211 = vector.load %arg7[%c5_140, %c0_141, %c0_142] : memref<16x8x128xf32, #tpu.memory_space<vmem>>, vector<1x8x128xf32>
    %212 = vector.shape_cast %211 : vector<1x8x128xf32> to vector<8x128xf32>
    %213 = vector.shape_cast %207 : vector<8x128xf32> to vector<1x8x128xf32>
    tpu.vector_store %arg7[%c5_140, %c0_141, %c0_142], %213 {strides = array<i32>} : memref<16x8x128xf32, #tpu.memory_space<vmem>>, vector<1x8x128xf32>,
    %c11_143 = arith.constant 11 : index
    %c0_144 = arith.constant 0 : index
    %c0_145 = arith.constant 0 : index
    %214 = vector.load %arg1[%c11_143, %c0_144, %c0_145] : memref<16x8x128xf32, #tpu.memory_space<vmem>>, vector<1x8x128xf32>
    %215 = vector.shape_cast %214 : vector<1x8x128xf32> to vector<8x128xf32>
    %216 = arith.mulf %0, %200 : vector<8x128xf32>
    %217 = arith.addf %215, %216 : vector<8x128xf32>
    %218 = arith.addf %217, %1 : vector<8x128xf32>
    %cst_146 = arith.constant 0.000000e+00 : f32
    %219 = vector.broadcast %cst_146 : f32 to vector<8x128xf32>
    %220 = arith.maximumf %218, %219 : vector<8x128xf32>
    %c4_147 = arith.constant 4 : index
    %c0_148 = arith.constant 0 : index
    %c0_149 = arith.constant 0 : index
    %221 = vector.load %arg1[%c4_147, %c0_148, %c0_149] : memref<16x8x128xf32, #tpu.memory_space<vmem>>, vector<1x8x128xf32>
    %222 = vector.shape_cast %221 : vector<1x8x128xf32> to vector<8x128xf32>
    %223 = arith.mulf %2, %207 : vector<8x128xf32>
    %224 = arith.addf %222, %223 : vector<8x128xf32>
    %225 = arith.addf %224, %3 : vector<8x128xf32>
    %cst_150 = arith.constant 0.000000e+00 : f32
    %226 = vector.broadcast %cst_150 : f32 to vector<8x128xf32>
    %227 = arith.maximumf %225, %226 : vector<8x128xf32>
    %c11_151 = arith.constant 11 : index
    %c0_152 = arith.constant 0 : index
    %c0_153 = arith.constant 0 : index
    %228 = vector.load %arg6[%c11_151, %c0_152, %c0_153] : memref<16x8x128xf32, #tpu.memory_space<vmem>>, vector<1x8x128xf32>
    %229 = vector.shape_cast %228 : vector<1x8x128xf32> to vector<8x128xf32>
    %230 = vector.shape_cast %220 : vector<8x128xf32> to vector<1x8x128xf32>
    tpu.vector_store %arg6[%c11_151, %c0_152, %c0_153], %230 {strides = array<i32>} : memref<16x8x128xf32, #tpu.memory_space<vmem>>, vector<1x8x128xf32>,
    %c4_154 = arith.constant 4 : index
    %c0_155 = arith.constant 0 : index
    %c0_156 = arith.constant 0 : index
    %231 = vector.load %arg7[%c4_154, %c0_155, %c0_156] : memref<16x8x128xf32, #tpu.memory_space<vmem>>, vector<1x8x128xf32>
    %232 = vector.shape_cast %231 : vector<1x8x128xf32> to vector<8x128xf32>
    %233 = vector.shape_cast %227 : vector<8x128xf32> to vector<1x8x128xf32>
    tpu.vector_store %arg7[%c4_154, %c0_155, %c0_156], %233 {strides = array<i32>} : memref<16x8x128xf32, #tpu.memory_space<vmem>>, vector<1x8x128xf32>,
    %c12_157 = arith.constant 12 : index
    %c0_158 = arith.constant 0 : index
    %c0_159 = arith.constant 0 : index
    %234 = vector.load %arg1[%c12_157, %c0_158, %c0_159] : memref<16x8x128xf32, #tpu.memory_space<vmem>>, vector<1x8x128xf32>
    %235 = vector.shape_cast %234 : vector<1x8x128xf32> to vector<8x128xf32>
    %236 = arith.mulf %0, %220 : vector<8x128xf32>
    %237 = arith.addf %235, %236 : vector<8x128xf32>
    %238 = arith.addf %237, %1 : vector<8x128xf32>
    %cst_160 = arith.constant 0.000000e+00 : f32
    %239 = vector.broadcast %cst_160 : f32 to vector<8x128xf32>
    %240 = arith.maximumf %238, %239 : vector<8x128xf32>
    %c3_161 = arith.constant 3 : index
    %c0_162 = arith.constant 0 : index
    %c0_163 = arith.constant 0 : index
    %241 = vector.load %arg1[%c3_161, %c0_162, %c0_163] : memref<16x8x128xf32, #tpu.memory_space<vmem>>, vector<1x8x128xf32>
    %242 = vector.shape_cast %241 : vector<1x8x128xf32> to vector<8x128xf32>
    %243 = arith.mulf %2, %227 : vector<8x128xf32>
    %244 = arith.addf %242, %243 : vector<8x128xf32>
    %245 = arith.addf %244, %3 : vector<8x128xf32>
    %cst_164 = arith.constant 0.000000e+00 : f32
    %246 = vector.broadcast %cst_164 : f32 to vector<8x128xf32>
    %247 = arith.maximumf %245, %246 : vector<8x128xf32>
    %c12_165 = arith.constant 12 : index
    %c0_166 = arith.constant 0 : index
    %c0_167 = arith.constant 0 : index
    %248 = vector.load %arg6[%c12_165, %c0_166, %c0_167] : memref<16x8x128xf32, #tpu.memory_space<vmem>>, vector<1x8x128xf32>
    %249 = vector.shape_cast %248 : vector<1x8x128xf32> to vector<8x128xf32>
    %250 = vector.shape_cast %240 : vector<8x128xf32> to vector<1x8x128xf32>
    tpu.vector_store %arg6[%c12_165, %c0_166, %c0_167], %250 {strides = array<i32>} : memref<16x8x128xf32, #tpu.memory_space<vmem>>, vector<1x8x128xf32>,
    %c3_168 = arith.constant 3 : index
    %c0_169 = arith.constant 0 : index
    %c0_170 = arith.constant 0 : index
    %251 = vector.load %arg7[%c3_168, %c0_169, %c0_170] : memref<16x8x128xf32, #tpu.memory_space<vmem>>, vector<1x8x128xf32>
    %252 = vector.shape_cast %251 : vector<1x8x128xf32> to vector<8x128xf32>
    %253 = vector.shape_cast %247 : vector<8x128xf32> to vector<1x8x128xf32>
    tpu.vector_store %arg7[%c3_168, %c0_169, %c0_170], %253 {strides = array<i32>} : memref<16x8x128xf32, #tpu.memory_space<vmem>>, vector<1x8x128xf32>,
    %c13_171 = arith.constant 13 : index
    %c0_172 = arith.constant 0 : index
    %c0_173 = arith.constant 0 : index
    %254 = vector.load %arg1[%c13_171, %c0_172, %c0_173] : memref<16x8x128xf32, #tpu.memory_space<vmem>>, vector<1x8x128xf32>
    %255 = vector.shape_cast %254 : vector<1x8x128xf32> to vector<8x128xf32>
    %256 = arith.mulf %0, %240 : vector<8x128xf32>
    %257 = arith.addf %255, %256 : vector<8x128xf32>
    %258 = arith.addf %257, %1 : vector<8x128xf32>
    %cst_174 = arith.constant 0.000000e+00 : f32
    %259 = vector.broadcast %cst_174 : f32 to vector<8x128xf32>
    %260 = arith.maximumf %258, %259 : vector<8x128xf32>
    %c2_175 = arith.constant 2 : index
    %c0_176 = arith.constant 0 : index
    %c0_177 = arith.constant 0 : index
    %261 = vector.load %arg1[%c2_175, %c0_176, %c0_177] : memref<16x8x128xf32, #tpu.memory_space<vmem>>, vector<1x8x128xf32>
    %262 = vector.shape_cast %261 : vector<1x8x128xf32> to vector<8x128xf32>
    %263 = arith.mulf %2, %247 : vector<8x128xf32>
    %264 = arith.addf %262, %263 : vector<8x128xf32>
    %265 = arith.addf %264, %3 : vector<8x128xf32>
    %cst_178 = arith.constant 0.000000e+00 : f32
    %266 = vector.broadcast %cst_178 : f32 to vector<8x128xf32>
    %267 = arith.maximumf %265, %266 : vector<8x128xf32>
    %c13_179 = arith.constant 13 : index
    %c0_180 = arith.constant 0 : index
    %c0_181 = arith.constant 0 : index
    %268 = vector.load %arg6[%c13_179, %c0_180, %c0_181] : memref<16x8x128xf32, #tpu.memory_space<vmem>>, vector<1x8x128xf32>
    %269 = vector.shape_cast %268 : vector<1x8x128xf32> to vector<8x128xf32>
    %270 = vector.shape_cast %260 : vector<8x128xf32> to vector<1x8x128xf32>
    tpu.vector_store %arg6[%c13_179, %c0_180, %c0_181], %270 {strides = array<i32>} : memref<16x8x128xf32, #tpu.memory_space<vmem>>, vector<1x8x128xf32>,
    %c2_182 = arith.constant 2 : index
    %c0_183 = arith.constant 0 : index
    %c0_184 = arith.constant 0 : index
    %271 = vector.load %arg7[%c2_182, %c0_183, %c0_184] : memref<16x8x128xf32, #tpu.memory_space<vmem>>, vector<1x8x128xf32>
    %272 = vector.shape_cast %271 : vector<1x8x128xf32> to vector<8x128xf32>
    %273 = vector.shape_cast %267 : vector<8x128xf32> to vector<1x8x128xf32>
    tpu.vector_store %arg7[%c2_182, %c0_183, %c0_184], %273 {strides = array<i32>} : memref<16x8x128xf32, #tpu.memory_space<vmem>>, vector<1x8x128xf32>,
    %c14_185 = arith.constant 14 : index
    %c0_186 = arith.constant 0 : index
    %c0_187 = arith.constant 0 : index
    %274 = vector.load %arg1[%c14_185, %c0_186, %c0_187] : memref<16x8x128xf32, #tpu.memory_space<vmem>>, vector<1x8x128xf32>
    %275 = vector.shape_cast %274 : vector<1x8x128xf32> to vector<8x128xf32>
    %276 = arith.mulf %0, %260 : vector<8x128xf32>
    %277 = arith.addf %275, %276 : vector<8x128xf32>
    %278 = arith.addf %277, %1 : vector<8x128xf32>
    %cst_188 = arith.constant 0.000000e+00 : f32
    %279 = vector.broadcast %cst_188 : f32 to vector<8x128xf32>
    %280 = arith.maximumf %278, %279 : vector<8x128xf32>
    %c1_189 = arith.constant 1 : index
    %c0_190 = arith.constant 0 : index
    %c0_191 = arith.constant 0 : index
    %281 = vector.load %arg1[%c1_189, %c0_190, %c0_191] : memref<16x8x128xf32, #tpu.memory_space<vmem>>, vector<1x8x128xf32>
    %282 = vector.shape_cast %281 : vector<1x8x128xf32> to vector<8x128xf32>
    %283 = arith.mulf %2, %267 : vector<8x128xf32>
    %284 = arith.addf %282, %283 : vector<8x128xf32>
    %285 = arith.addf %284, %3 : vector<8x128xf32>
    %cst_192 = arith.constant 0.000000e+00 : f32
    %286 = vector.broadcast %cst_192 : f32 to vector<8x128xf32>
    %287 = arith.maximumf %285, %286 : vector<8x128xf32>
    %c14_193 = arith.constant 14 : index
    %c0_194 = arith.constant 0 : index
    %c0_195 = arith.constant 0 : index
    %288 = vector.load %arg6[%c14_193, %c0_194, %c0_195] : memref<16x8x128xf32, #tpu.memory_space<vmem>>, vector<1x8x128xf32>
    %289 = vector.shape_cast %288 : vector<1x8x128xf32> to vector<8x128xf32>
    %290 = vector.shape_cast %280 : vector<8x128xf32> to vector<1x8x128xf32>
    tpu.vector_store %arg6[%c14_193, %c0_194, %c0_195], %290 {strides = array<i32>} : memref<16x8x128xf32, #tpu.memory_space<vmem>>, vector<1x8x128xf32>,
    %c1_196 = arith.constant 1 : index
    %c0_197 = arith.constant 0 : index
    %c0_198 = arith.constant 0 : index
    %291 = vector.load %arg7[%c1_196, %c0_197, %c0_198] : memref<16x8x128xf32, #tpu.memory_space<vmem>>, vector<1x8x128xf32>
    %292 = vector.shape_cast %291 : vector<1x8x128xf32> to vector<8x128xf32>
    %293 = vector.shape_cast %287 : vector<8x128xf32> to vector<1x8x128xf32>
    tpu.vector_store %arg7[%c1_196, %c0_197, %c0_198], %293 {strides = array<i32>} : memref<16x8x128xf32, #tpu.memory_space<vmem>>, vector<1x8x128xf32>,
    %c15_199 = arith.constant 15 : index
    %c0_200 = arith.constant 0 : index
    %c0_201 = arith.constant 0 : index
    %294 = vector.load %arg1[%c15_199, %c0_200, %c0_201] : memref<16x8x128xf32, #tpu.memory_space<vmem>>, vector<1x8x128xf32>
    %295 = vector.shape_cast %294 : vector<1x8x128xf32> to vector<8x128xf32>
    %296 = arith.mulf %0, %280 : vector<8x128xf32>
    %297 = arith.addf %295, %296 : vector<8x128xf32>
    %298 = arith.addf %297, %1 : vector<8x128xf32>
    %cst_202 = arith.constant 0.000000e+00 : f32
    %299 = vector.broadcast %cst_202 : f32 to vector<8x128xf32>
    %300 = arith.maximumf %298, %299 : vector<8x128xf32>
    %c0_203 = arith.constant 0 : index
    %c0_204 = arith.constant 0 : index
    %c0_205 = arith.constant 0 : index
    %301 = vector.load %arg1[%c0_203, %c0_204, %c0_205] : memref<16x8x128xf32, #tpu.memory_space<vmem>>, vector<1x8x128xf32>
    %302 = vector.shape_cast %301 : vector<1x8x128xf32> to vector<8x128xf32>
    %303 = arith.mulf %2, %287 : vector<8x128xf32>
    %304 = arith.addf %302, %303 : vector<8x128xf32>
    %305 = arith.addf %304, %3 : vector<8x128xf32>
    %cst_206 = arith.constant 0.000000e+00 : f32
    %306 = vector.broadcast %cst_206 : f32 to vector<8x128xf32>
    %307 = arith.maximumf %305, %306 : vector<8x128xf32>
    %c15_207 = arith.constant 15 : index
    %c0_208 = arith.constant 0 : index
    %c0_209 = arith.constant 0 : index
    %308 = vector.load %arg6[%c15_207, %c0_208, %c0_209] : memref<16x8x128xf32, #tpu.memory_space<vmem>>, vector<1x8x128xf32>
    %309 = vector.shape_cast %308 : vector<1x8x128xf32> to vector<8x128xf32>
    %310 = vector.shape_cast %300 : vector<8x128xf32> to vector<1x8x128xf32>
    tpu.vector_store %arg6[%c15_207, %c0_208, %c0_209], %310 {strides = array<i32>} : memref<16x8x128xf32, #tpu.memory_space<vmem>>, vector<1x8x128xf32>,
    %c0_210 = arith.constant 0 : index
    %c0_211 = arith.constant 0 : index
    %c0_212 = arith.constant 0 : index
    %311 = vector.load %arg7[%c0_210, %c0_211, %c0_212] : memref<16x8x128xf32, #tpu.memory_space<vmem>>, vector<1x8x128xf32>
    %312 = vector.shape_cast %311 : vector<1x8x128xf32> to vector<8x128xf32>
    %313 = vector.shape_cast %307 : vector<8x128xf32> to vector<1x8x128xf32>
    tpu.vector_store %arg7[%c0_210, %c0_211, %c0_212], %313 {strides = array<i32>} : memref<16x8x128xf32, #tpu.memory_space<vmem>>, vector<1x8x128xf32>,
    return
  }
  func.func @transform_0(%arg0: i32) -> (i32, i32, i32) {
    %c0_i32 = arith.constant 0 : i32
    %c0_i32_0 = arith.constant 0 : i32
    %c0_i32_1 = arith.constant 0 : i32
    return %c0_i32, %arg0, %c0_i32_0 : i32, i32, i32
  }
  func.func @transform_1(%arg0: i32) -> (i32, i32) {
    %c0_i32 = arith.constant 0 : i32
    %c0_i32_0 = arith.constant 0 : i32
    return %arg0, %c0_i32 : i32, i32
  }
  func.func @transform_2(%arg0: i32) -> (i32, i32) {
    %c0_i32 = arith.constant 0 : i32
    %c0_i32_0 = arith.constant 0 : i32
    return %arg0, %c0_i32 : i32, i32
  }
  func.func @transform_3(%arg0: i32) -> (i32, i32) {
    %c0_i32 = arith.constant 0 : i32
    %c0_i32_0 = arith.constant 0 : i32
    return %arg0, %c0_i32 : i32, i32
  }
  func.func @transform_4(%arg0: i32) -> (i32, i32) {
    %c0_i32 = arith.constant 0 : i32
    %c0_i32_0 = arith.constant 0 : i32
    return %arg0, %c0_i32 : i32, i32
  }
  func.func @transform_5(%arg0: i32) -> (i32, i32, i32) {
    %c0_i32 = arith.constant 0 : i32
    %c0_i32_0 = arith.constant 0 : i32
    %c0_i32_1 = arith.constant 0 : i32
    return %c0_i32, %arg0, %c0_i32_0 : i32, i32, i32
  }
  func.func @transform_6(%arg0: i32) -> (i32, i32, i32) {
    %c0_i32 = arith.constant 0 : i32
    %c0_i32_0 = arith.constant 0 : i32
    %c0_i32_1 = arith.constant 0 : i32
    return %c0_i32, %arg0, %c0_i32_0 : i32, i32, i32
  }
}

</mosaic_0001>

<llo_original>
// kernel: spacial_irnn.3
$region0: #{spacial_irnn.3}
  #allocation0 [shape = 'u32[]', space=smem, size = 0x4, offset = 0x4, fixed_abs, tag = 'smem constant byte address 0x4 - core index']
  #allocation1 [shape = 'u32[144,128]{1,0:T(1,128)}', space=vmem, size = 0x12000, scoped, tag = 'internal scratch']
  %s0 = inlined_call_operand.vmem [shape: f32[16,8,128], index: 0, kind: input, shape index: {}]
  %s1 = inlined_call_operand.vmem [shape: f32[8,128], index: 1, kind: input, shape index: {}]
  %s2 = inlined_call_operand.vmem [shape: f32[8,128], index: 2, kind: input, shape index: {}]
  %s3 = inlined_call_operand.vmem [shape: f32[8,128], index: 3, kind: input, shape index: {}]
  %s4 = inlined_call_operand.vmem [shape: f32[8,128], index: 4, kind: input, shape index: {}]
  %s5 = inlined_call_operand.vmem [shape: f32[16,8,128], index: 5, kind: output, shape index: {0}]
  %s6 = inlined_call_operand.vmem [shape: f32[16,8,128], index: 6, kind: output, shape index: {1}]
  %7 = xla_tuple %s5, %s6
  %s8 = sld [smem:[#allocation0]]
  $region38: #{spacial_irnn.3} parent=0
    _
  %s10 = ssub.s32 1, %s8
  %s11 = scalar_select 0, %s10, %s8
  // Predicated region
  $region2: #{spacial_irnn.3} parent=0 // pred_check
    _
  $region3: #{spacial_irnn.3} parent=0 // pred_check_branch
    %13 = sbr.rel (0) target = $region5
  $region4: #{spacial_irnn.3} parent=0 // pred_region
    _
  $region5: #{spacial_irnn.3} parent=0 // pred_fallthru
    _
  // Predicated region
  $region6: #{spacial_irnn.3} parent=0 // pred_check
    _
  $region7: #{spacial_irnn.3} parent=0 // pred_check_branch
    %15 = sbr.rel (0) target = $region9
  $region8: #{spacial_irnn.3} parent=0 // pred_region
    _
  $region9: #{spacial_irnn.3} parent=0 // pred_fallthru
    _
  // Predicated region
  $region10: #{spacial_irnn.3} parent=0 // pred_check
    _
  $region11: #{spacial_irnn.3} parent=0 // pred_check_branch
    %17 = sbr.rel (0) target = $region13
  $region12: #{spacial_irnn.3} parent=0 // pred_region
    _
  $region13: #{spacial_irnn.3} parent=0 // pred_fallthru
    _
  // Predicated region
  $region14: #{spacial_irnn.3} parent=0 // pred_check
    _
  $region15: #{spacial_irnn.3} parent=0 // pred_check_branch
    %19 = sbr.rel (0) target = $region17
  $region16: #{spacial_irnn.3} parent=0 // pred_region
    _
  $region17: #{spacial_irnn.3} parent=0 // pred_fallthru
    _
  // Predicated region
  $region18: #{spacial_irnn.3} parent=0 // pred_check
    _
  $region19: #{spacial_irnn.3} parent=0 // pred_check_branch
    %21 = sbr.rel (0) target = $region21
  $region20: #{spacial_irnn.3} parent=0 // pred_region
    _
  $region21: #{spacial_irnn.3} parent=0 // pred_fallthru
    _
  %v22 = vld [vmem:[%s1] sm:$0xff]
  %v23 = vld [vmem:[%s2] sm:$0xff]
  %v24 = vld [vmem:[%s3] sm:$0xff]
  %v25 = vld [vmem:[%s4] sm:$0xff]
  %v26 = vld [vmem:[%s0] sm:$0xff]
  %27 = vst [vmem:[%s5] sm:$0xff] %v26
  %s28 = scalar_lea.vmem %s0, 120
  %v29 = vld [vmem:[%s28] sm:$0xff]
  %s30 = scalar_lea.vmem %s6, 120
  %31 = vst [vmem:[%s30] sm:$0xff] %v29
  %s32 = scalar_lea.vmem %s0, 8
  %v33 = vld [vmem:[%s32] sm:$0xff]
  %v34 = vmul.f32 %v22, %v26
  %v35 = vadd.f32 %v33, %v34
  %v36 = vadd.f32 %v35, %v23
  %v37 = vmax.f32 %v36, 0.0
  %s38 = scalar_lea.vmem %s0, 112
  %v39 = vld [vmem:[%s38] sm:$0xff]
  %v40 = vmul.f32 %v24, %v29
  %v41 = vadd.f32 %v39, %v40
  %v42 = vadd.f32 %v41, %v25
  %v43 = vmax.f32 %v42, 0.0
  %s44 = scalar_lea.vmem %s5, 8
  %45 = vst [vmem:[%s44] sm:$0xff] %v37
  %s46 = scalar_lea.vmem %s6, 112
  %47 = vst [vmem:[%s46] sm:$0xff] %v43
  %s48 = scalar_lea.vmem %s0, 16
  %v49 = vld [vmem:[%s48] sm:$0xff]
  %v50 = vmul.f32 %v22, %v37
  %v51 = vadd.f32 %v49, %v50
  %v52 = vadd.f32 %v51, %v23
  %v53 = vmax.f32 %v52, 0.0
  %s54 = scalar_lea.vmem %s0, 104
  %v55 = vld [vmem:[%s54] sm:$0xff]
  %v56 = vmul.f32 %v24, %v43
  %v57 = vadd.f32 %v55, %v56
  %v58 = vadd.f32 %v57, %v25
  %v59 = vmax.f32 %v58, 0.0
  %s60 = scalar_lea.vmem %s5, 16
  %61 = vst [vmem:[%s60] sm:$0xff] %v53
  %s62 = scalar_lea.vmem %s6, 104
  %63 = vst [vmem:[%s62] sm:$0xff] %v59
  %s64 = scalar_lea.vmem %s0, 24
  %v65 = vld [vmem:[%s64] sm:$0xff]
  %v66 = vmul.f32 %v22, %v53
  %v67 = vadd.f32 %v65, %v66
  %v68 = vadd.f32 %v67, %v23
  %v69 = vmax.f32 %v68, 0.0
  %s70 = scalar_lea.vmem %s0, 96
  %v71 = vld [vmem:[%s70] sm:$0xff]
  %v72 = vmul.f32 %v24, %v59
  %v73 = vadd.f32 %v71, %v72
  %v74 = vadd.f32 %v73, %v25
  %v75 = vmax.f32 %v74, 0.0
  %s76 = scalar_lea.vmem %s5, 24
  %77 = vst [vmem:[%s76] sm:$0xff] %v69
  %s78 = scalar_lea.vmem %s6, 96
  %79 = vst [vmem:[%s78] sm:$0xff] %v75
  %s80 = scalar_lea.vmem %s0, 32
  %v81 = vld [vmem:[%s80] sm:$0xff]
  %v82 = vmul.f32 %v22, %v69
  %v83 = vadd.f32 %v81, %v82
  %v84 = vadd.f32 %v83, %v23
  %v85 = vmax.f32 %v84, 0.0
  %s86 = scalar_lea.vmem %s0, 88
  %v87 = vld [vmem:[%s86] sm:$0xff]
  %v88 = vmul.f32 %v24, %v75
  %v89 = vadd.f32 %v87, %v88
  %v90 = vadd.f32 %v89, %v25
  %v91 = vmax.f32 %v90, 0.0
  %s92 = scalar_lea.vmem %s5, 32
  %93 = vst [vmem:[%s92] sm:$0xff] %v85
  %s94 = scalar_lea.vmem %s6, 88
  %95 = vst [vmem:[%s94] sm:$0xff] %v91
  %s96 = scalar_lea.vmem %s0, 40
  %v97 = vld [vmem:[%s96] sm:$0xff]
  %v98 = vmul.f32 %v22, %v85
  %v99 = vadd.f32 %v97, %v98
  %v100 = vadd.f32 %v99, %v23
  %v101 = vmax.f32 %v100, 0.0
  %s102 = scalar_lea.vmem %s0, 80
  %v103 = vld [vmem:[%s102] sm:$0xff]
  %v104 = vmul.f32 %v24, %v91
  %v105 = vadd.f32 %v103, %v104
  %v106 = vadd.f32 %v105, %v25
  %v107 = vmax.f32 %v106, 0.0
  %s108 = scalar_lea.vmem %s5, 40
  %109 = vst [vmem:[%s108] sm:$0xff] %v101
  %s110 = scalar_lea.vmem %s6, 80
  %111 = vst [vmem:[%s110] sm:$0xff] %v107
  %s112 = scalar_lea.vmem %s0, 48
  %v113 = vld [vmem:[%s112] sm:$0xff]
  %v114 = vmul.f32 %v22, %v101
  %v115 = vadd.f32 %v113, %v114
  %v116 = vadd.f32 %v115, %v23
  %v117 = vmax.f32 %v116, 0.0
  %s118 = scalar_lea.vmem %s0, 72
  %v119 = vld [vmem:[%s118] sm:$0xff]
  %v120 = vmul.f32 %v24, %v107
  %v121 = vadd.f32 %v119, %v120
  %v122 = vadd.f32 %v121, %v25
  %v123 = vmax.f32 %v122, 0.0
  %s124 = scalar_lea.vmem %s5, 48
  %125 = vst [vmem:[%s124] sm:$0xff] %v117
  %s126 = scalar_lea.vmem %s6, 72
  %127 = vst [vmem:[%s126] sm:$0xff] %v123
  %s128 = scalar_lea.vmem %s0, 56
  %v129 = vld [vmem:[%s128] sm:$0xff]
  %v130 = vmul.f32 %v22, %v117
  %v131 = vadd.f32 %v129, %v130
  %v132 = vadd.f32 %v131, %v23
  %v133 = vmax.f32 %v132, 0.0
  %s134 = scalar_lea.vmem %s0, 64
  %v135 = vld [vmem:[%s134] sm:$0xff]
  %v136 = vmul.f32 %v24, %v123
  %v137 = vadd.f32 %v135, %v136
  %v138 = vadd.f32 %v137, %v25
  %v139 = vmax.f32 %v138, 0.0
  %s140 = scalar_lea.vmem %s5, 56
  %141 = vst [vmem:[%s140] sm:$0xff] %v133
  %s142 = scalar_lea.vmem %s6, 64
  %143 = vst [vmem:[%s142] sm:$0xff] %v139
  %v144 = vld [vmem:[%s134] sm:$0xff]
  %v145 = vmul.f32 %v22, %v133
  %v146 = vadd.f32 %v144, %v145
  %v147 = vadd.f32 %v146, %v23
  %v148 = vmax.f32 %v147, 0.0
  %v149 = vld [vmem:[%s128] sm:$0xff]
  %v150 = vmul.f32 %v24, %v139
  %v151 = vadd.f32 %v149, %v150
  %v152 = vadd.f32 %v151, %v25
  %v153 = vmax.f32 %v152, 0.0
  %s154 = scalar_lea.vmem %s5, 64
  %155 = vst [vmem:[%s154] sm:$0xff] %v148
  %s156 = scalar_lea.vmem %s6, 56
  %157 = vst [vmem:[%s156] sm:$0xff] %v153
  %v158 = vld [vmem:[%s118] sm:$0xff]
  %v159 = vmul.f32 %v22, %v148
  %v160 = vadd.f32 %v158, %v159
  %v161 = vadd.f32 %v160, %v23
  %v162 = vmax.f32 %v161, 0.0
  %v163 = vld [vmem:[%s112] sm:$0xff]
  %v164 = vmul.f32 %v24, %v153
  %v165 = vadd.f32 %v163, %v164
  %v166 = vadd.f32 %v165, %v25
  %v167 = vmax.f32 %v166, 0.0
  %s168 = scalar_lea.vmem %s5, 72
  %169 = vst [vmem:[%s168] sm:$0xff] %v162
  %s170 = scalar_lea.vmem %s6, 48
  %171 = vst [vmem:[%s170] sm:$0xff] %v167
  %v172 = vld [vmem:[%s102] sm:$0xff]
  %v173 = vmul.f32 %v22, %v162
  %v174 = vadd.f32 %v172, %v173
  %v175 = vadd.f32 %v174, %v23
  %v176 = vmax.f32 %v175, 0.0
  %v177 = vld [vmem:[%s96] sm:$0xff]
  %v178 = vmul.f32 %v24, %v167
  %v179 = vadd.f32 %v177, %v178
  %v180 = vadd.f32 %v179, %v25
  %v181 = vmax.f32 %v180, 0.0
  %s182 = scalar_lea.vmem %s5, 80
  %183 = vst [vmem:[%s182] sm:$0xff] %v176
  %s184 = scalar_lea.vmem %s6, 40
  %185 = vst [vmem:[%s184] sm:$0xff] %v181
  %v186 = vld [vmem:[%s86] sm:$0xff]
  %v187 = vmul.f32 %v22, %v176
  %v188 = vadd.f32 %v186, %v187
  %v189 = vadd.f32 %v188, %v23
  %v190 = vmax.f32 %v189, 0.0
  %v191 = vld [vmem:[%s80] sm:$0xff]
  %v192 = vmul.f32 %v24, %v181
  %v193 = vadd.f32 %v191, %v192
  %v194 = vadd.f32 %v193, %v25
  %v195 = vmax.f32 %v194, 0.0
  %s196 = scalar_lea.vmem %s5, 88
  %197 = vst [vmem:[%s196] sm:$0xff] %v190
  %s198 = scalar_lea.vmem %s6, 32
  %199 = vst [vmem:[%s198] sm:$0xff] %v195
  %v200 = vld [vmem:[%s70] sm:$0xff]
  %v201 = vmul.f32 %v22, %v190
  %v202 = vadd.f32 %v200, %v201
  %v203 = vadd.f32 %v202, %v23
  %v204 = vmax.f32 %v203, 0.0
  %v205 = vld [vmem:[%s64] sm:$0xff]
  %v206 = vmul.f32 %v24, %v195
  %v207 = vadd.f32 %v205, %v206
  %v208 = vadd.f32 %v207, %v25
  %v209 = vmax.f32 %v208, 0.0
  %s210 = scalar_lea.vmem %s5, 96
  %211 = vst [vmem:[%s210] sm:$0xff] %v204
  %s212 = scalar_lea.vmem %s6, 24
  %213 = vst [vmem:[%s212] sm:$0xff] %v209
  %v214 = vld [vmem:[%s54] sm:$0xff]
  %v215 = vmul.f32 %v22, %v204
  %v216 = vadd.f32 %v214, %v215
  %v217 = vadd.f32 %v216, %v23
  %v218 = vmax.f32 %v217, 0.0
  %v219 = vld [vmem:[%s48] sm:$0xff]
  %v220 = vmul.f32 %v24, %v209
  %v221 = vadd.f32 %v219, %v220
  %v222 = vadd.f32 %v221, %v25
  %v223 = vmax.f32 %v222, 0.0
  %s224 = scalar_lea.vmem %s5, 104
  %225 = vst [vmem:[%s224] sm:$0xff] %v218
  %s226 = scalar_lea.vmem %s6, 16
  %227 = vst [vmem:[%s226] sm:$0xff] %v223
  %v228 = vld [vmem:[%s38] sm:$0xff]
  %v229 = vmul.f32 %v22, %v218
  %v230 = vadd.f32 %v228, %v229
  %v231 = vadd.f32 %v230, %v23
  %v232 = vmax.f32 %v231, 0.0
  %v233 = vld [vmem:[%s32] sm:$0xff]
  %v234 = vmul.f32 %v24, %v223
  %v235 = vadd.f32 %v233, %v234
  %v236 = vadd.f32 %v235, %v25
  %v237 = vmax.f32 %v236, 0.0
  %s238 = scalar_lea.vmem %s5, 112
  %239 = vst [vmem:[%s238] sm:$0xff] %v232
  %s240 = scalar_lea.vmem %s6, 8
  %241 = vst [vmem:[%s240] sm:$0xff] %v237
  %v242 = vld [vmem:[%s28] sm:$0xff]
  %v243 = vmul.f32 %v22, %v232
  %v244 = vadd.f32 %v242, %v243
  %v245 = vadd.f32 %v244, %v23
  %v246 = vmax.f32 %v245, 0.0
  %v247 = vld [vmem:[%s0] sm:$0xff]
  %v248 = vmul.f32 %v24, %v237
  %v249 = vadd.f32 %v247, %v248
  %v250 = vadd.f32 %v249, %v25
  %v251 = vmax.f32 %v250, 0.0
  %s252 = scalar_lea.vmem %s5, 120
  %253 = vst [vmem:[%s252] sm:$0xff] %v246
  %254 = vst [vmem:[%s6] sm:$0xff] %v251
  // Predicated region
  $region22: #{spacial_irnn.3} parent=0 // pred_check
    _
  $region23: #{spacial_irnn.3} parent=0 // pred_check_branch
    %256 = sbr.rel (0) target = $region25
  $region24: #{spacial_irnn.3} parent=0 // pred_region
    _
  $region25: #{spacial_irnn.3} parent=0 // pred_fallthru
    _
  // Predicated region
  $region26: #{spacial_irnn.3} parent=0 // pred_check
    _
  $region27: #{spacial_irnn.3} parent=0 // pred_check_branch
    %258 = sbr.rel (0) target = $region29
  $region28: #{spacial_irnn.3} parent=0 // pred_region
    _
  $region29: #{spacial_irnn.3} parent=0 // pred_fallthru
    _
  // Predicated region
  $region30: #{spacial_irnn.3} parent=0 // pred_check
    _
  $region31: #{spacial_irnn.3} parent=0 // pred_check_branch
    %260 = sbr.rel (0) target = $region33
  $region32: #{spacial_irnn.3} parent=0 // pred_region
    _
  $region33: #{spacial_irnn.3} parent=0 // pred_fallthru
    _
  // Predicated region
  $region34: #{spacial_irnn.3} parent=0 // pred_check
    _
  $region35: #{spacial_irnn.3} parent=0 // pred_check_branch
    %262 = sbr.rel (0) target = $region37
  $region36: #{spacial_irnn.3} parent=0 // pred_region
    _
  $region37: #{spacial_irnn.3} parent=0 // pred_fallthru
    _

</llo_original>
